<compile_context>
chip_gen: v7x
topology: tpu7x:2x2x1
jax: 0.10.0
libtpu: 0.0.40
codegen_flags: <defaults>
</compile_context>

<pallas_src>
import jax
import jax.numpy as jnp
from jax.experimental import pallas as pl
from jax.experimental.pallas import tpu as pltpu

LANE = 128          # TPU vreg lane width
NEG_INF = -1e30     # bias for padded action columns -> exp() == 0, softmax unchanged


def _round_up(n, m):
    return ((n + m - 1) // m) * m


def policy_net_kernel(x_ref, w1_ref, b1_ref, w2_ref, b2_ref, out_ref):
    # fc1 + ReLU  (MXU matmul, f32 accumulation; bias/ReLU in f32 on the VPU)
    h = jnp.dot(x_ref[...], w1_ref[...], preferred_element_type=jnp.float32)
    h = jnp.maximum(h + b1_ref[...], 0.0)
    # fc2 (cast activations to the weight dtype so bf16 weights hit the bf16 MXU path)
    logits = jnp.dot(h.astype(w2_ref.dtype), w2_ref[...],
                     preferred_element_type=jnp.float32)
    logits = logits + b2_ref[...]          # padded columns carry -1e30 bias
    # numerically stable softmax along dim=1 (last axis), all in f32
    m = jnp.max(logits, axis=-1, keepdims=True)
    e = jnp.exp(logits - m)
    denom = jnp.sum(e, axis=-1, keepdims=True)
    out_ref[...] = (e * pl.reciprocal(denom, approx=False)).astype(out_ref.dtype)


def policy_net_forward(x, w1, b1, w2, b2, *, tile_b=512, mxu_dtype=jnp.float32):
    B, S = x.shape
    H = w1.shape[1]
    A = w2.shape[1]

    # ---- lane-dense output: pad action dim up to a full 128-lane register ----
    Ap = _round_up(max(A, LANE), LANE)
    w2p = jnp.zeros((H, Ap), dtype=w2.dtype).at[:, :A].set(w2)
    b2p = jnp.full((1, Ap), NEG_INF, dtype=jnp.float32).at[:, :A].set(b2.astype(jnp.float32))

    # ---- batch tiling (sublane-aligned); pad B to a whole number of tiles ----
    TILE_B = min(tile_b, _round_up(B, 8))
    Bp = _round_up(B, TILE_B)
    xp = jnp.zeros((Bp, S), dtype=x.dtype).at[:B, :].set(x)

    # ---- dtype for the MXU inputs (bf16 halves x/weight HBM traffic on v6e/v7x) ----
    xp = xp.astype(mxu_dtype)
    w1c = w1.astype(mxu_dtype)
    w2p = w2p.astype(mxu_dtype)
    b1c = b1.astype(jnp.float32)

    grid = (Bp // TILE_B,)

    out = pl.pallas_call(
        policy_net_kernel,
        out_shape=jax.ShapeDtypeStruct((Bp, Ap), jnp.float32),
        grid=grid,
        in_specs=[
            pl.BlockSpec((TILE_B, S), lambda i: (i, 0)),   # x tile, pipelined over batch
            pl.BlockSpec((S, H),      lambda i: (0, 0)),   # w1 resident in VMEM
            pl.BlockSpec((1, H),      lambda i: (0, 0)),   # b1 resident
            pl.BlockSpec((H, Ap),     lambda i: (0, 0)),   # w2 (lane-padded) resident
            pl.BlockSpec((1, Ap),     lambda i: (0, 0)),   # b2 (lane-padded) resident
        ],
        out_specs=pl.BlockSpec((TILE_B, Ap), lambda i: (i, 0)),
        compiler_params=pltpu.CompilerParams(
            dimension_semantics=("parallel",),             # megacore shard on v7x
            vmem_limit_bytes=32 * 1024 * 1024,             # tile working set << 32 MiB
        ),
    )(xp, w1c, b1c, w2p, b2p)

    return out[:B, :A]


def init_params(key, state_dim, hidden_dim, action_dim):
    # Mimic PyTorch nn.Linear default init: U(-1/sqrt(fan_in), 1/sqrt(fan_in))
    k1, k2, k3, k4 = jax.random.split(key, 4)
    bound1 = 1.0 / jnp.sqrt(state_dim)
    bound2 = 1.0 / jnp.sqrt(hidden_dim)
    w1 = jax.random.uniform(k1, (state_dim, hidden_dim), jnp.float32, -bound1, bound1)
    b1 = jax.random.uniform(k2, (1, hidden_dim), jnp.float32, -bound1, bound1)
    w2 = jax.random.uniform(k3, (hidden_dim, action_dim), jnp.float32, -bound2, bound2)
    b2 = jax.random.uniform(k4, (1, action_dim), jnp.float32, -bound2, bound2)
    return w1, b1, w2, b2


if __name__ == "__main__":
    state_dim, hidden_dim, action_dim = 16, 32, 4
    batch = 200   # not a multiple of the tile -> exercises batch padding + multi-step grid

    key = jax.random.PRNGKey(0)
    kx, kp = jax.random.split(key)
    x = jax.random.normal(kx, (batch, state_dim), jnp.float32)
    w1, b1, w2, b2 = init_params(kp, state_dim, hidden_dim, action_dim)

    # pure-JAX reference
    h_ref = jnp.maximum(x @ w1 + b1, 0.0)
    ref = jax.nn.softmax(h_ref @ w2 + b2, axis=1)

    # f32 MXU path (tight tolerance)
    probs = policy_net_forward(x, w1, b1, w2, b2, tile_b=64, mxu_dtype=jnp.float32)
    probs = jax.block_until_ready(probs)
    assert probs.shape == (batch, action_dim)
    assert jnp.allclose(probs.sum(axis=1), 1.0, atol=1e-5)
    assert jnp.allclose(probs, ref, atol=1e-5, rtol=1e-5)

    # bf16 MXU-input path for v6e/v7x (looser tolerance, f32 accumulation + f32 softmax)
    probs_bf16 = policy_net_forward(x, w1, b1, w2, b2, tile_b=64, mxu_dtype=jnp.bfloat16)
    probs_bf16 = jax.block_until_ready(probs_bf16)
    assert probs_bf16.shape == (batch, action_dim)
    assert jnp.allclose(probs_bf16, ref, atol=3e-2, rtol=0)

    print("KERNEL_OK")
</pallas_src>

<mosaic_0001>
module attributes {stable_mosaic.version = 11 : i64} {
  func.func @policy_net_kernel(%arg0: i32, %arg1: memref<64x16xf32, #tpu.memory_space<vmem>>, %arg2: memref<16x32xf32, #tpu.memory_space<vmem>>, %arg3: memref<1x32xf32, #tpu.memory_space<vmem>>, %arg4: memref<32x128xf32, #tpu.memory_space<vmem>>, %arg5: memref<1x128xf32, #tpu.memory_space<vmem>>, %arg6: memref<64x128xf32, #tpu.memory_space<vmem>>) attributes {dimension_semantics = [#tpu.dimension_semantics<parallel>], iteration_bounds = array<i64: 4>, scalar_prefetch = 0 : i64, scratch_operands = 0 : i64, tpu.core_type = #tpu.core_type<tc>, window_params = [{transform_indices = @transform_0, window_bounds = array<i64: 64, 16>}, {pipeline_mode = #tpu.pipeline_mode<synchronous>, transform_indices = @transform_1, window_bounds = array<i64: 16, 32>}, {pipeline_mode = #tpu.pipeline_mode<synchronous>, transform_indices = @transform_2, window_bounds = array<i64: 1, 32>}, {pipeline_mode = #tpu.pipeline_mode<synchronous>, transform_indices = @transform_3, window_bounds = array<i64: 32, 128>}, {pipeline_mode = #tpu.pipeline_mode<synchronous>, transform_indices = @transform_4, window_bounds = array<i64: 1, 128>}, {transform_indices = @transform_5, window_bounds = array<i64: 64, 128>}]} {
    %c0 = arith.constant 0 : index
    %c0_0 = arith.constant 0 : index
    %0 = vector.load %arg1[%c0, %c0_0] : memref<64x16xf32, #tpu.memory_space<vmem>>, vector<64x16xf32>
    %c0_1 = arith.constant 0 : index
    %c0_2 = arith.constant 0 : index
    %1 = vector.load %arg2[%c0_1, %c0_2] : memref<16x32xf32, #tpu.memory_space<vmem>>, vector<16x32xf32>
    %cst = arith.constant dense<0.000000e+00> : vector<64x32xf32>
    %2 = tpu.matmul %0, %1, %cst {dimension_numbers = #tpu.dot_dimension_numbers<[1], [0], [0], [1], [0, 0, 1, 1], [], []>} : vector<64x16xf32>, vector<16x32xf32>, vector<64x32xf32> -> vector<64x32xf32>
    %c0_3 = arith.constant 0 : index
    %c0_4 = arith.constant 0 : index
    %3 = vector.load %arg3[%c0_3, %c0_4] : memref<1x32xf32, #tpu.memory_space<vmem>>, vector<1x32xf32>
    %4 = vector.broadcast %3 : vector<1x32xf32> to vector<64x32xf32>
    %5 = arith.addf %2, %4 : vector<64x32xf32>
    %cst_5 = arith.constant 0.000000e+00 : f32
    %6 = vector.broadcast %cst_5 : f32 to vector<64x32xf32>
    %7 = arith.maximumf %5, %6 : vector<64x32xf32>
    %c0_6 = arith.constant 0 : index
    %c0_7 = arith.constant 0 : index
    %8 = vector.load %arg4[%c0_6, %c0_7] : memref<32x128xf32, #tpu.memory_space<vmem>>, vector<32x128xf32>
    %cst_8 = arith.constant dense<0.000000e+00> : vector<64x128xf32>
    %9 = tpu.matmul %7, %8, %cst_8 {dimension_numbers = #tpu.dot_dimension_numbers<[1], [0], [0], [1], [0, 0, 1, 1], [], []>} : vector<64x32xf32>, vector<32x128xf32>, vector<64x128xf32> -> vector<64x128xf32>
    %c0_9 = arith.constant 0 : index
    %c0_10 = arith.constant 0 : index
    %10 = vector.load %arg5[%c0_9, %c0_10] : memref<1x128xf32, #tpu.memory_space<vmem>>, vector<1x128xf32>
    %11 = vector.broadcast %10 : vector<1x128xf32> to vector<64x128xf32>
    %12 = arith.addf %9, %11 : vector<64x128xf32>
    %cst_11 = arith.constant dense<0xFF800000> : vector<64xf32>
    %13 = vector.multi_reduction <maximumf>, %12, %cst_11 [1] : vector<64x128xf32> to vector<64xf32>
    %14 = vector.shape_cast %13 : vector<64xf32> to vector<64x1xf32>
    %15 = vector.broadcast %14 : vector<64x1xf32> to vector<64x128xf32>
    %16 = arith.subf %12, %15 : vector<64x128xf32>
    %17 = math.exp %16 : vector<64x128xf32>
    %cst_12 = arith.constant dense<0.000000e+00> : vector<64xf32>
    %18 = vector.multi_reduction <add>, %17, %cst_12 [1] : vector<64x128xf32> to vector<64xf32>
    %19 = vector.shape_cast %18 : vector<64xf32> to vector<64x1xf32>
    %20 = tpu.reciprocal %19 : vector<64x1xf32> -> vector<64x1xf32>
    %21 = vector.broadcast %20 : vector<64x1xf32> to vector<64x128xf32>
    %22 = arith.mulf %17, %21 : vector<64x128xf32>
    %c0_13 = arith.constant 0 : index
    %c0_14 = arith.constant 0 : index
    %23 = vector.load %arg6[%c0_13, %c0_14] : memref<64x128xf32, #tpu.memory_space<vmem>>, vector<64x128xf32>
    tpu.vector_store %arg6[%c0_13, %c0_14], %22 {strides = array<i32>} : memref<64x128xf32, #tpu.memory_space<vmem>>, vector<64x128xf32>,
    return
  }
  func.func @transform_0(%arg0: i32) -> (i32, i32) {
    %c0_i32 = arith.constant 0 : i32
    %c0_i32_0 = arith.constant 0 : i32
    return %arg0, %c0_i32 : i32, i32
  }
  func.func @transform_1(%arg0: i32) -> (i32, i32) {
    %c0_i32 = arith.constant 0 : i32
    %c0_i32_0 = arith.constant 0 : i32
    %c0_i32_1 = arith.constant 0 : i32
    return %c0_i32, %c0_i32_0 : i32, i32
  }
  func.func @transform_2(%arg0: i32) -> (i32, i32) {
    %c0_i32 = arith.constant 0 : i32
    %c0_i32_0 = arith.constant 0 : i32
    %c0_i32_1 = arith.constant 0 : i32
    return %c0_i32, %c0_i32_0 : i32, i32
  }
  func.func @transform_3(%arg0: i32) -> (i32, i32) {
    %c0_i32 = arith.constant 0 : i32
    %c0_i32_0 = arith.constant 0 : i32
    %c0_i32_1 = arith.constant 0 : i32
    return %c0_i32, %c0_i32_0 : i32, i32
  }
  func.func @transform_4(%arg0: i32) -> (i32, i32) {
    %c0_i32 = arith.constant 0 : i32
    %c0_i32_0 = arith.constant 0 : i32
    %c0_i32_1 = arith.constant 0 : i32
    return %c0_i32, %c0_i32_0 : i32, i32
  }
  func.func @transform_5(%arg0: i32) -> (i32, i32) {
    %c0_i32 = arith.constant 0 : i32
    %c0_i32_0 = arith.constant 0 : i32
    return %arg0, %c0_i32 : i32, i32
  }
}

</mosaic_0001>

<llo_original>
// kernel: tpu_custom_call.1
$region0: #{tpu_custom_call.1}
  #allocation0 [shape = 'u32[]', space=smem, size = 0x4, offset = 0x4, fixed_abs, tag = 'smem constant byte address 0x4 - core index']
  #allocation1 [shape = 'u32[144,128]{1,0:T(1,128)}', space=vmem, size = 0x12000, scoped, tag = 'internal scratch']
  %s0 = inlined_call_operand.vmem [shape: f32[256,16], index: 0, kind: input, shape index: {}]
  %s1 = inlined_call_operand.vmem [shape: f32[16,32], index: 1, kind: input, shape index: {}]
  %s2 = inlined_call_operand.vmem [shape: f32[1,32], index: 2, kind: input, shape index: {}]
  %s3 = inlined_call_operand.vmem [shape: f32[32,128], index: 3, kind: input, shape index: {}]
  %s4 = inlined_call_operand.vmem [shape: f32[1,128], index: 4, kind: input, shape index: {}]
  %s5 = inlined_call_operand.hbm [shape: f32[256,128], index: 5, kind: output, shape index: {}]
  %s6 = sld [smem:[#allocation0]]
  $region53: #{tpu_custom_call.1} parent=0
    _
  %s8 = ssub.s32 1, %s6
  %s9 = scalar_select 0, %s8, %s6
  $region1: #{tpu_custom_call.1} parent=0
    #allocation2 [shape = 'u8[65536]{0}', space=vmem, size = 0x10000, scoped, tag = 'output window, operand 0']
    #allocation3 [shape = 's32[2]{0}', space=sflag, size = 0x8, scoped, tag = 'scoped memory for tpu_custom_call.1']
    %10 = vsyncpa [#allocation3], 0
    %s11 = scalar_lea.sflag [#allocation3], 1
    %12 = vsyncpa %s11, 0
    loop: start=0, step=1, limit=6
    $region2: #{tpu_custom_call.1} parent=1 // loop_pre_header
      _
    $region3: #{tpu_custom_call.1} parent=1 // loop_header
      %s14 = sphi 0, %s18
      %p15 = scmp.ge.s32.totalorder %s14, 6
      %s24 = sphi 0, %s26
      %s27 = sphi 0, %s24
      %s28 = sphi 0, %s27
      %s44 = sphi 0, %s28
      %s48 = sphi 0, %s48
      %s50 = sphi 0, %s48
      %s51 = sphi 0, %s50
      %s65 = sphi 0, %s51
      %s69 = sphi 0, %s69
      %s71 = sphi 0, %s69
      %s72 = sphi 0, %s71
      %s86 = sphi 0, %s72
      %s90 = sphi 0, %s90
      %s92 = sphi 0, %s90
      %s93 = sphi 0, %s92
      %s107 = sphi 0, %s93
      %s111 = sphi 0, %s111
      %s113 = sphi 0, %s111
      %s114 = sphi 0, %s113
      %s128 = sphi 0, %s114
      %s134 = sphi 0, %s136
      %s137 = sphi 0, %s134
      %s138 = sphi 0, %s137
      %s154 = sphi 0, %s138
    $region4: #{tpu_custom_call.1} parent=1 // loop_header_branch
      %17 = sbr.rel (%p15) target = $region8
    $region5: #{tpu_custom_call.1} parent=1 // loop_body
      %s19 = ssub.s32 %s14, 1
      %s20 = ssub.s32 %s14, 2
      %s21 = sadd.s32 %s14, 1
      %s22 = ssub.s32 %s14, %s21
      %p23 = scmp.eq.s32.totalorder %s22, 0
      %s25 = sadd.s32 %s24, 1
      %s26 = scalar_select %p23, %s24, %s25
      %p29 = pneg %p23
      %p30 = scmp.eq.s32.totalorder %s14, 3
      %p31 = por %p29, %p30
      %p32 = scmp.ne.s32.totalorder %s24, %s27
      %p33 = scmp.eq.s32.totalorder %s14, 0
      %p34 = por %p32, %p33
      %p35 = scmp.ne.s32.totalorder %s24, %s27
      %p36 = scmp.eq.s32.totalorder %s19, 3
      %p37 = por %p35, %p36
      %p38 = scmp.ne.s32.totalorder %s27, %s28
      %p39 = scmp.eq.s32.totalorder %s19, 0
      %p40 = por %p38, %p39
      %p41 = scmp.ne.s32.totalorder %s27, %s28
      %p42 = scmp.eq.s32.totalorder %s20, 3
      %p43 = por %p41, %p42
      %p45 = scmp.ne.s32.totalorder %s28, %s44
      %p46 = scmp.eq.s32.totalorder %s20, 0
      %p47 = por %p45, %p46
      %s49 = sadd.s32 %s48, 1
      %p52 = scmp.eq.s32.totalorder %s14, 3
      %p53 = scmp.ne.s32.totalorder %s48, %s50
      %p54 = scmp.eq.s32.totalorder %s14, 0
      %p55 = por %p53, %p54
      %p56 = scmp.ne.s32.totalorder %s48, %s50
      %p57 = scmp.eq.s32.totalorder %s19, 3
      %p58 = por %p56, %p57
      %p59 = scmp.ne.s32.totalorder %s50, %s51
      %p60 = scmp.eq.s32.totalorder %s19, 0
      %p61 = por %p59, %p60
      %p62 = scmp.ne.s32.totalorder %s50, %s51
      %p63 = scmp.eq.s32.totalorder %s20, 3
      %p64 = por %p62, %p63
      %p66 = scmp.ne.s32.totalorder %s51, %s65
      %p67 = scmp.eq.s32.totalorder %s20, 0
      %p68 = por %p66, %p67
      %s70 = sadd.s32 %s69, 1
      %p73 = scmp.eq.s32.totalorder %s14, 3
      %p74 = scmp.ne.s32.totalorder %s69, %s71
      %p75 = scmp.eq.s32.totalorder %s14, 0
      %p76 = por %p74, %p75
      %p77 = scmp.ne.s32.totalorder %s69, %s71
      %p78 = scmp.eq.s32.totalorder %s19, 3
      %p79 = por %p77, %p78
      %p80 = scmp.ne.s32.totalorder %s71, %s72
      %p81 = scmp.eq.s32.totalorder %s19, 0
      %p82 = por %p80, %p81
      %p83 = scmp.ne.s32.totalorder %s71, %s72
      %p84 = scmp.eq.s32.totalorder %s20, 3
      %p85 = por %p83, %p84
      %p87 = scmp.ne.s32.totalorder %s72, %s86
      %p88 = scmp.eq.s32.totalorder %s20, 0
      %p89 = por %p87, %p88
      %s91 = sadd.s32 %s90, 1
      %p94 = scmp.eq.s32.totalorder %s14, 3
      %p95 = scmp.ne.s32.totalorder %s90, %s92
      %p96 = scmp.eq.s32.totalorder %s14, 0
      %p97 = por %p95, %p96
      %p98 = scmp.ne.s32.totalorder %s90, %s92
      %p99 = scmp.eq.s32.totalorder %s19, 3
      %p100 = por %p98, %p99
      %p101 = scmp.ne.s32.totalorder %s92, %s93
      %p102 = scmp.eq.s32.totalorder %s19, 0
      %p103 = por %p101, %p102
      %p104 = scmp.ne.s32.totalorder %s92, %s93
      %p105 = scmp.eq.s32.totalorder %s20, 3
      %p106 = por %p104, %p105
      %p108 = scmp.ne.s32.totalorder %s93, %s107
      %p109 = scmp.eq.s32.totalorder %s20, 0
      %p110 = por %p108, %p109
      %s112 = sadd.s32 %s111, 1
      %p115 = scmp.eq.s32.totalorder %s14, 3
      %p116 = scmp.ne.s32.totalorder %s111, %s113
      %p117 = scmp.eq.s32.totalorder %s14, 0
      %p118 = por %p116, %p117
      %p119 = scmp.ne.s32.totalorder %s111, %s113
      %p120 = scmp.eq.s32.totalorder %s19, 3
      %p121 = por %p119, %p120
      %p122 = scmp.ne.s32.totalorder %s113, %s114
      %p123 = scmp.eq.s32.totalorder %s19, 0
      %p124 = por %p122, %p123
      %p125 = scmp.ne.s32.totalorder %s113, %s114
      %p126 = scmp.eq.s32.totalorder %s20, 3
      %p127 = por %p125, %p126
      %p129 = scmp.ne.s32.totalorder %s114, %s128
      %p130 = scmp.eq.s32.totalorder %s20, 0
      %p131 = por %p129, %p130
      %s132 = ssub.s32 %s14, %s21
      %p133 = scmp.eq.s32.totalorder %s132, 0
      %s135 = sadd.s32 %s134, 1
      %s136 = scalar_select %p133, %s134, %s135
      %p139 = pneg %p133
      %p140 = scmp.eq.s32.totalorder %s14, 3
      %p141 = por %p139, %p140
      %p142 = scmp.ne.s32.totalorder %s134, %s137
      %p143 = scmp.eq.s32.totalorder %s14, 0
      %p144 = por %p142, %p143
      %p145 = scmp.ne.s32.totalorder %s134, %s137
      %p146 = scmp.eq.s32.totalorder %s19, 3
      %p147 = por %p145, %p146
      %p148 = scmp.ne.s32.totalorder %s137, %s138
      %p149 = scmp.eq.s32.totalorder %s19, 0
      %p150 = por %p148, %p149
      %p151 = scmp.ne.s32.totalorder %s137, %s138
      %p152 = scmp.eq.s32.totalorder %s20, 3
      %p153 = por %p151, %p152
      %p155 = scmp.ne.s32.totalorder %s138, %s154
      %p156 = scmp.eq.s32.totalorder %s20, 0
      %p157 = por %p155, %p156
      %p158 = scmp.le.s32.totalorder 1, %s14
      %p159 = scmp.lt.s32.totalorder %s14, 5
      %p160 = pnand %p158, %p159
      %p161 = pneg %p160
      // Predicated region
      $region9: #{tpu_custom_call.1} parent=5 // pred_check
        _
      $region10: #{tpu_custom_call.1} parent=5 // pred_check_branch
        %163 = sbr.rel (%p160) target = $region12
      $region11: #{tpu_custom_call.1} parent=5 // pred_region
        %s164 = ssub.s32 %s14, 1
        // Predicated region
        $region13: #{tpu_custom_call.1} parent=11 // pred_check
          %p165 = pneg %p61
        $region14: #{tpu_custom_call.1} parent=11 // pred_check_branch
          %167 = sbr.rel (%p165) target = $region16
        $region15: #{tpu_custom_call.1} parent=11 // pred_region
          _
        $region16: #{tpu_custom_call.1} parent=11 // pred_fallthru
          _
        // Predicated region
        $region17: #{tpu_custom_call.1} parent=11 // pred_check
          %p168 = pneg %p82
        $region18: #{tpu_custom_call.1} parent=11 // pred_check_branch
          %170 = sbr.rel (%p168) target = $region20
        $region19: #{tpu_custom_call.1} parent=11 // pred_region
          _
        $region20: #{tpu_custom_call.1} parent=11 // pred_fallthru
          _
        // Predicated region
        $region21: #{tpu_custom_call.1} parent=11 // pred_check
          %p171 = pneg %p103
        $region22: #{tpu_custom_call.1} parent=11 // pred_check_branch
          %173 = sbr.rel (%p171) target = $region24
        $region23: #{tpu_custom_call.1} parent=11 // pred_region
          _
        $region24: #{tpu_custom_call.1} parent=11 // pred_fallthru
          _
        // Predicated region
        $region25: #{tpu_custom_call.1} parent=11 // pred_check
          %p174 = pneg %p124
        $region26: #{tpu_custom_call.1} parent=11 // pred_check_branch
          %176 = sbr.rel (%p174) target = $region28
        $region27: #{tpu_custom_call.1} parent=11 // pred_region
          _
        $region28: #{tpu_custom_call.1} parent=11 // pred_fallthru
          _
      $region12: #{tpu_custom_call.1} parent=5 // pred_fallthru
        _
      %p177 = scmp.lt.s32.totalorder %s14, 4
      // Predicated region
      $region29: #{tpu_custom_call.1} parent=5 // pred_check
        %p178 = pneg %p177
      $region30: #{tpu_custom_call.1} parent=5 // pred_check_branch
        %180 = sbr.rel (%p178) target = $region32
      $region31: #{tpu_custom_call.1} parent=5 // pred_region
        // Predicated region
        $region33: #{tpu_custom_call.1} parent=31 // pred_check
          %p181 = pneg %p34
        $region34: #{tpu_custom_call.1} parent=31 // pred_check_branch
          %183 = sbr.rel (%p181) target = $region36
        $region35: #{tpu_custom_call.1} parent=31 // pred_region
          %s184 = smul.u32 8, %s14
          %p185 = scmp.lt.s32.totalorder %s184, 31
          %s186 = scalar_select %p185, %s184, 31
          %s187 = smul.addr %s186, 8
          %s188 = scalar_lea.vmem %s0, %s187
          %s189 = smul.u32 8, %s14
        $region36: #{tpu_custom_call.1} parent=31 // pred_fallthru
          _
      $region32: #{tpu_custom_call.1} parent=5 // pred_fallthru
        _
      %p190 = scmp.le.s32.totalorder 1, %s14
      %p191 = scmp.lt.s32.totalorder %s14, 5
      %p192 = pnand %p190, %p191
      %p193 = pneg %p192
      // Predicated region
      $region37: #{tpu_custom_call.1} parent=5 // pred_check
        _
      $region38: #{tpu_custom_call.1} parent=5 // pred_check_branch
        %195 = sbr.rel (%p192) target = $region40
      $region39: #{tpu_custom_call.1} parent=5 // pred_region
        %s196 = ssub.s32 %s14, 1
        %s197 = smul.u32 8, %s19
        %p198 = scmp.lt.s32.totalorder %s197, 31
        %s199 = scalar_select %p198, %s197, 31
        %s200 = smul.addr %s199, 8
        %s201 = scalar_lea.vmem %s0, %s200
        %p202 = pneg %p40
        %p203 = pneg %p37
        %p204 = pneg %p61
        %p205 = pneg %p58
        %p206 = pneg %p82
        %p207 = pneg %p79
        %p208 = pneg %p103
        %p209 = pneg %p100
        %p210 = pneg %p124
        %p211 = pneg %p121
        %p212 = pneg %p150
        %p213 = pneg %p147
        %s214 = sand.u32 %s137, 1
        %s215 = scalar_lea.sflag [#allocation3], %s214
        %s216 = sand.u32 %s137, 1
        %s217 = smul.addr %s216, 64
        %s218 = scalar_lea.vmem [#allocation2], %s217
        %s219 = smul.u32 8, %s19
        %p220 = scmp.lt.s32.totalorder %s219, 31
        %s221 = scalar_select %p220, %s219, 31
        %s222 = smul.addr %s221, 8
        %s223 = scalar_lea.vmem %s0, %s222
        %s224 = smul.u32 8, %s19
        %s225 = smul.u32 8, %s19
        %v226 = vld [vmem:[%s223] sm:$0xff]
        %v227 = vld [vmem:[%s223 + $0x8] sm:$0xff]
        %v228 = vld [vmem:[%s223 + $0x10] sm:$0xff]
        %v229 = vld [vmem:[%s223 + $0x18] sm:$0xff]
        %v230 = vld [vmem:[%s223 + $0x20] sm:$0xff]
        %v231 = vld [vmem:[%s223 + $0x28] sm:$0xff]
        %v232 = vld [vmem:[%s223 + $0x30] sm:$0xff]
        %v233 = vld [vmem:[%s223 + $0x38] sm:$0xff]
        %v234 = vld [vmem:[%s1] sm:$0xff]
        %v235 = vld [vmem:[%s1 + $0x8] sm:$0xff]
        %v236 = vld [vmem:[%s2] sm:$0x1]
        %v238 = vlaneseq
        %v239 = vshrl.u32 %v238, 7
        %v240 = vsub.s32 0, %v239
        %v241 = vrot.slane %v236, %v240
        %vm243 = vcmask 130048
        %v245 = vsel %vm243, %v226, 0
        %v248 = vsel %vm243, %v227, 0
        %v251 = vsel %vm243, %v228, 0
        %v254 = vsel %vm243, %v229, 0
        %v257 = vsel %vm243, %v230, 0
        %v260 = vsel %vm243, %v231, 0
        %v263 = vsel %vm243, %v232, 0
        %v266 = vsel %vm243, %v233, 0
        %268 = vmatprep.subr.mxu0 0.0
        %269 = vmatpush1.msra.mxu0 %v234
        %270 = vmatprep.subr.mxu0 0.0
        %271 = vmatpush1.msra.mxu0 %v235
        %272 = vmatprep.subr.mxu0 0.0
        %273 = vmatpush1.msra.mxu0 0.0
        %274 = vmatprep.subr.mxu0 0.0
        %275 = vmatpush1.msra.mxu0 0.0
        %276 = vmatprep.subr.mxu0 0.0
        %277 = vmatpush1.msra.mxu0 0.0
        %278 = vmatprep.subr.mxu0 0.0
        %279 = vmatpush1.msra.mxu0 0.0
        %280 = vmatprep.subr.mxu0 0.0
        %281 = vmatpush1.msra.mxu0 0.0
        %282 = vmatprep.subr.mxu0 0.0
        %283 = vmatpush1.msra.mxu0 0.0
        %284 = vmatprep.subr.mxu0 0.0
        %285 = vmatpush1.msra.mxu0 0.0
        %286 = vmatprep.subr.mxu0 0.0
        %287 = vmatpush1.msra.mxu0 0.0
        %288 = vmatprep.subr.mxu0 0.0
        %289 = vmatpush1.msra.mxu0 0.0
        %290 = vmatprep.subr.mxu0 0.0
        %291 = vmatpush1.msra.mxu0 0.0
        %292 = vmatprep.subr.mxu0 0.0
        %293 = vmatpush1.msra.mxu0 0.0
        %294 = vmatprep.subr.mxu0 0.0
        %295 = vmatpush1.msra.mxu0 0.0
        %296 = vmatprep.subr.mxu0 0.0
        %297 = vmatpush1.msra.mxu0 0.0
        %298 = vmatprep.subr.mxu0 0.0
        %299 = vmatpush1.msra.mxu0 0.0
        %300 = vmatprep.subr.mxu0 0.0
        %301 = vmatpush1.msra.mxu0 0.0
        %302 = vmatprep.subr.mxu0 0.0
        %303 = vmatpush1.msra.mxu0 0.0
        %304 = vmatprep.subr.mxu0 0.0
        %305 = vmatpush1.msra.mxu0 0.0
        %306 = vmatprep.subr.mxu0 0.0
        %307 = vmatpush1.msra.mxu0 0.0
        %308 = vmatprep.subr.mxu0 0.0
        %309 = vmatpush1.msra.mxu0 0.0
        %310 = vmatprep.subr.mxu0 0.0
        %311 = vmatpush1.msra.mxu0 0.0
        %312 = vmatprep.subr.mxu0 0.0
        %313 = vmatpush1.msra.mxu0 0.0
        %314 = vmatprep.subr.mxu0 0.0
        %315 = vmatpush1.msra.mxu0 0.0
        %316 = vmatprep.subr.mxu0 0.0
        %317 = vmatpush1.msra.mxu0 0.0
        %318 = vmatprep.subr.mxu0 0.0
        %319 = vmatpush1.msra.mxu0 0.0
        %320 = vmatprep.subr.mxu0 0.0
        %321 = vmatpush1.msra.mxu0 0.0
        %322 = vmatprep.subr.mxu0 0.0
        %323 = vmatpush1.msra.mxu0 0.0
        %324 = vmatprep.subr.mxu0 0.0
        %325 = vmatpush1.msra.mxu0 0.0
        %326 = vmatprep.subr.mxu0 0.0
        %327 = vmatpush1.msra.mxu0 0.0
        %328 = vmatprep.subr.mxu0 0.0
        %329 = vmatpush1.msra.mxu0 0.0
        %330 = vmatprep.subr.mxu0 0.0
        %331 = vmatpush1.msra.mxu0 0.0
        %332 = vmatprep.mubr.f32.mxu0 0.0
        %333 = vmatmul.mubr.f32.gmra.mrb[0].mxu0 %v245
        %v334 = vpop.f32.mrb[0].mxu0
        %v335 = vadd.f32 %v241, %v334
        %v336 = vpop.f32.mrb[0].mxu0
        %337 = vmatprep.mubr.f32.mxu0 0.0
        %338 = vmatmul.mubr.f32.gmra.mrb[0].mxu0 %v248
        %v339 = vpop.f32.mrb[0].mxu0
        %v340 = vadd.f32 %v241, %v339
        %v341 = vpop.f32.mrb[0].mxu0
        %342 = vmatprep.mubr.f32.mxu0 0.0
        %343 = vmatmul.mubr.f32.gmra.mrb[0].mxu0 %v251
        %v344 = vpop.f32.mrb[0].mxu0
        %v345 = vadd.f32 %v241, %v344
        %v346 = vpop.f32.mrb[0].mxu0
        %347 = vmatprep.mubr.f32.mxu0 0.0
        %348 = vmatmul.mubr.f32.gmra.mrb[0].mxu0 %v254
        %v349 = vpop.f32.mrb[0].mxu0
        %v350 = vadd.f32 %v241, %v349
        %v351 = vpop.f32.mrb[0].mxu0
        %352 = vmatprep.mubr.f32.mxu0 0.0
        %353 = vmatmul.mubr.f32.gmra.mrb[0].mxu0 %v257
        %v354 = vpop.f32.mrb[0].mxu0
        %v355 = vadd.f32 %v241, %v354
        %v356 = vpop.f32.mrb[0].mxu0
        %357 = vmatprep.mubr.f32.mxu0 0.0
        %358 = vmatmul.mubr.f32.gmra.mrb[0].mxu0 %v260
        %v359 = vpop.f32.mrb[0].mxu0
        %v360 = vadd.f32 %v241, %v359
        %v361 = vpop.f32.mrb[0].mxu0
        %362 = vmatprep.mubr.f32.mxu0 0.0
        %363 = vmatmul.mubr.f32.gmra.mrb[0].mxu0 %v263
        %v364 = vpop.f32.mrb[0].mxu0
        %v365 = vadd.f32 %v241, %v364
        %v366 = vpop.f32.mrb[0].mxu0
        %367 = vmatprep.mubr.f32.mxu0 0.0
        %368 = vmatmul.mubr.f32.gmra.mrb[0].mxu0 %v266
        %v369 = vpop.f32.mrb[0].mxu0
        %v370 = vadd.f32 %v241, %v369
        %v371 = vpop.f32.mrb[0].mxu0
        %372 = vdwg.mxu0
        %v373 = vmax.f32 %v335, 0.0
        %v374 = vmax.f32 %v340, 0.0
        %v375 = vmax.f32 %v345, 0.0
        %v376 = vmax.f32 %v350, 0.0
        %v377 = vmax.f32 %v355, 0.0
        %v378 = vmax.f32 %v360, 0.0
        %v379 = vmax.f32 %v365, 0.0
        %v380 = vmax.f32 %v370, 0.0
        %v381 = vld [vmem:[%s3] sm:$0xff]
        %v382 = vld [vmem:[%s3 + $0x8] sm:$0xff]
        %v383 = vld [vmem:[%s3 + $0x10] sm:$0xff]
        %v384 = vld [vmem:[%s3 + $0x18] sm:$0xff]
        %v385 = vld [vmem:[%s4] sm:$0x1]
        %v387 = vlaneseq
        %v388 = vshrl.u32 %v387, 7
        %v389 = vsub.s32 0, %v388
        %v390 = vrot.slane %v385, %v389
        %vm392 = vcmask 261120
        %v394 = vsel %vm392, %v373, 0
        %v397 = vsel %vm392, %v374, 0
        %v400 = vsel %vm392, %v375, 0
        %v403 = vsel %vm392, %v376, 0
        %v406 = vsel %vm392, %v377, 0
        %v409 = vsel %vm392, %v378, 0
        %v412 = vsel %vm392, %v379, 0
        %v415 = vsel %vm392, %v380, 0
        %417 = vmatprep.subr.mxu0 0.0
        %418 = vmatpush1.msra.mxu0 %v381
        %419 = vmatprep.subr.mxu0 0.0
        %420 = vmatpush1.msra.mxu0 %v382
        %421 = vmatprep.subr.mxu0 0.0
        %422 = vmatpush1.msra.mxu0 %v383
        %423 = vmatprep.subr.mxu0 0.0
        %424 = vmatpush1.msra.mxu0 %v384
        %425 = vmatprep.subr.mxu0 0.0
        %426 = vmatpush1.msra.mxu0 0.0
        %427 = vmatprep.subr.mxu0 0.0
        %428 = vmatpush1.msra.mxu0 0.0
        %429 = vmatprep.subr.mxu0 0.0
        %430 = vmatpush1.msra.mxu0 0.0
        %431 = vmatprep.subr.mxu0 0.0
        %432 = vmatpush1.msra.mxu0 0.0
        %433 = vmatprep.subr.mxu0 0.0
        %434 = vmatpush1.msra.mxu0 0.0
        %435 = vmatprep.subr.mxu0 0.0
        %436 = vmatpush1.msra.mxu0 0.0
        %437 = vmatprep.subr.mxu0 0.0
        %438 = vmatpush1.msra.mxu0 0.0
        %439 = vmatprep.subr.mxu0 0.0
        %440 = vmatpush1.msra.mxu0 0.0
        %441 = vmatprep.subr.mxu0 0.0
        %442 = vmatpush1.msra.mxu0 0.0
        %443 = vmatprep.subr.mxu0 0.0
        %444 = vmatpush1.msra.mxu0 0.0
        %445 = vmatprep.subr.mxu0 0.0
        %446 = vmatpush1.msra.mxu0 0.0
        %447 = vmatprep.subr.mxu0 0.0
        %448 = vmatpush1.msra.mxu0 0.0
        %449 = vmatprep.subr.mxu0 0.0
        %450 = vmatpush1.msra.mxu0 0.0
        %451 = vmatprep.subr.mxu0 0.0
        %452 = vmatpush1.msra.mxu0 0.0
        %453 = vmatprep.subr.mxu0 0.0
        %454 = vmatpush1.msra.mxu0 0.0
        %455 = vmatprep.subr.mxu0 0.0
        %456 = vmatpush1.msra.mxu0 0.0
        %457 = vmatprep.subr.mxu0 0.0
        %458 = vmatpush1.msra.mxu0 0.0
        %459 = vmatprep.subr.mxu0 0.0
        %460 = vmatpush1.msra.mxu0 0.0
        %461 = vmatprep.subr.mxu0 0.0
        %462 = vmatpush1.msra.mxu0 0.0
        %463 = vmatprep.subr.mxu0 0.0
        %464 = vmatpush1.msra.mxu0 0.0
        %465 = vmatprep.subr.mxu0 0.0
        %466 = vmatpush1.msra.mxu0 0.0
        %467 = vmatprep.subr.mxu0 0.0
        %468 = vmatpush1.msra.mxu0 0.0
        %469 = vmatprep.subr.mxu0 0.0
        %470 = vmatpush1.msra.mxu0 0.0
        %471 = vmatprep.subr.mxu0 0.0
        %472 = vmatpush1.msra.mxu0 0.0
        %473 = vmatprep.subr.mxu0 0.0
        %474 = vmatpush1.msra.mxu0 0.0
        %475 = vmatprep.subr.mxu0 0.0
        %476 = vmatpush1.msra.mxu0 0.0
        %477 = vmatprep.subr.mxu0 0.0
        %478 = vmatpush1.msra.mxu0 0.0
        %479 = vmatprep.subr.mxu0 0.0
        %480 = vmatpush1.msra.mxu0 0.0
        %481 = vmatprep.mubr.f32.mxu0 0.0
        %482 = vmatmul.mubr.f32.gmra.mrb[0].mxu0 %v394
        %v483 = vpop.f32.mrb[0].mxu0
        %v484 = vadd.f32 %v390, %v483
        %v485 = vpop.f32.mrb[0].mxu0
        %486 = vmatprep.mubr.f32.mxu0 0.0
        %487 = vmatmul.mubr.f32.gmra.mrb[0].mxu0 %v397
        %v488 = vpop.f32.mrb[0].mxu0
        %v489 = vadd.f32 %v390, %v488
        %v490 = vpop.f32.mrb[0].mxu0
        %491 = vmatprep.mubr.f32.mxu0 0.0
        %492 = vmatmul.mubr.f32.gmra.mrb[0].mxu0 %v400
        %v493 = vpop.f32.mrb[0].mxu0
        %v494 = vadd.f32 %v390, %v493
        %v495 = vpop.f32.mrb[0].mxu0
        %496 = vmatprep.mubr.f32.mxu0 0.0
        %497 = vmatmul.mubr.f32.gmra.mrb[0].mxu0 %v403
        %v498 = vpop.f32.mrb[0].mxu0
        %v499 = vadd.f32 %v390, %v498
        %v500 = vpop.f32.mrb[0].mxu0
        %501 = vmatprep.mubr.f32.mxu0 0.0
        %502 = vmatmul.mubr.f32.gmra.mrb[0].mxu0 %v406
        %v503 = vpop.f32.mrb[0].mxu0
        %v504 = vadd.f32 %v390, %v503
        %v505 = vpop.f32.mrb[0].mxu0
        %506 = vmatprep.mubr.f32.mxu0 0.0
        %507 = vmatmul.mubr.f32.gmra.mrb[0].mxu0 %v409
        %v508 = vpop.f32.mrb[0].mxu0
        %v509 = vadd.f32 %v390, %v508
        %v510 = vpop.f32.mrb[0].mxu0
        %511 = vmatprep.mubr.f32.mxu0 0.0
        %512 = vmatmul.mubr.f32.gmra.mrb[0].mxu0 %v412
        %v513 = vpop.f32.mrb[0].mxu0
        %v514 = vadd.f32 %v390, %v513
        %v515 = vpop.f32.mrb[0].mxu0
        %516 = vmatprep.mubr.f32.mxu0 0.0
        %517 = vmatmul.mubr.f32.gmra.mrb[0].mxu0 %v415
        %v518 = vpop.f32.mrb[0].mxu0
        %v519 = vadd.f32 %v390, %v518
        %v520 = vpop.f32.mrb[0].mxu0
        %521 = vdwg.mxu0
        %522 = vmax.xlane.f32.xlu0 %v484
        %v523 = vpop.xlane.xlu0 %522
        %524 = vmax.xlane.f32.xlu0 %v489
        %v525 = vpop.xlane.xlu0 %524
        %526 = vmax.xlane.f32.xlu0 %v494
        %v527 = vpop.xlane.xlu0 %526
        %528 = vmax.xlane.f32.xlu0 %v499
        %v529 = vpop.xlane.xlu0 %528
        %530 = vmax.xlane.f32.xlu0 %v504
        %v531 = vpop.xlane.xlu0 %530
        %532 = vmax.xlane.f32.xlu0 %v509
        %v533 = vpop.xlane.xlu0 %532
        %534 = vmax.xlane.f32.xlu0 %v514
        %v535 = vpop.xlane.xlu0 %534
        %536 = vmax.xlane.f32.xlu0 %v519
        %v537 = vpop.xlane.xlu0 %536
        %v538 = vsub.f32 %v484, %v523
        %v539 = vsub.f32 %v489, %v525
        %v540 = vsub.f32 %v494, %v527
        %v541 = vsub.f32 %v499, %v529
        %v542 = vsub.f32 %v504, %v531
        %v543 = vsub.f32 %v509, %v533
        %v544 = vsub.f32 %v514, %v535
        %v545 = vsub.f32 %v519, %v537
        %v546 = vmul.f32 %v538, 1.442695
        %v547 = vpow.pop %v546
        %v548 = vmul.f32 %v539, 1.442695
        %v549 = vpow.pop %v548
        %v550 = vmul.f32 %v540, 1.442695
        %v551 = vpow.pop %v550
        %v552 = vmul.f32 %v541, 1.442695
        %v553 = vpow.pop %v552
        %v554 = vmul.f32 %v542, 1.442695
        %v555 = vpow.pop %v554
        %v556 = vmul.f32 %v543, 1.442695
        %v557 = vpow.pop %v556
        %v558 = vmul.f32 %v544, 1.442695
        %v559 = vpow.pop %v558
        %v560 = vmul.f32 %v545, 1.442695
        %v561 = vpow.pop %v560
        %562 = vadd.xlane.f32.xlu0 %v547
        %v563 = vpop.xlane.xlu0 %562
        %564 = vadd.xlane.f32.xlu0 %v549
        %v565 = vpop.xlane.xlu0 %564
        %566 = vadd.xlane.f32.xlu0 %v551
        %v567 = vpop.xlane.xlu0 %566
        %568 = vadd.xlane.f32.xlu0 %v553
        %v569 = vpop.xlane.xlu0 %568
        %570 = vadd.xlane.f32.xlu0 %v555
        %v571 = vpop.xlane.xlu0 %570
        %572 = vadd.xlane.f32.xlu0 %v557
        %v573 = vpop.xlane.xlu0 %572
        %574 = vadd.xlane.f32.xlu0 %v559
        %v575 = vpop.xlane.xlu0 %574
        %576 = vadd.xlane.f32.xlu0 %v561
        %v577 = vpop.xlane.xlu0 %576
        %v578 = vrcp.pop %v563
        %v579 = vrcp.pop %v565
        %v580 = vrcp.pop %v567
        %v581 = vrcp.pop %v569
        %v582 = vrcp.pop %v571
        %v583 = vrcp.pop %v573
        %v584 = vrcp.pop %v575
        %v585 = vrcp.pop %v577
        %v586 = vmul.f32 %v547, %v578
        %v587 = vmul.f32 %v549, %v579
        %v588 = vmul.f32 %v551, %v580
        %v589 = vmul.f32 %v553, %v581
        %v590 = vmul.f32 %v555, %v582
        %v591 = vmul.f32 %v557, %v583
        %v592 = vmul.f32 %v559, %v584
        %v593 = vmul.f32 %v561, %v585
        %594 = vst [vmem:[%s218] sm:$0xff] %v586
        %595 = vst [vmem:[%s218 + $0x8] sm:$0xff] %v587
        %596 = vst [vmem:[%s218 + $0x10] sm:$0xff] %v588
        %597 = vst [vmem:[%s218 + $0x18] sm:$0xff] %v589
        %598 = vst [vmem:[%s218 + $0x20] sm:$0xff] %v590
        %599 = vst [vmem:[%s218 + $0x28] sm:$0xff] %v591
        %600 = vst [vmem:[%s218 + $0x30] sm:$0xff] %v592
        %601 = vst [vmem:[%s218 + $0x38] sm:$0xff] %v593
        %s602 = sand.u32 %s137, 1
        %s603 = scalar_lea.sflag [#allocation3], %s602
        %s604 = sand.u32 %s137, 1
        %s605 = smul.addr %s604, 64
        %s606 = scalar_lea.vmem [#allocation2], %s605
        // Predicated region
        $region41: #{tpu_custom_call.1} parent=39 // pred_check
          %p607 = pneg %p147
        $region42: #{tpu_custom_call.1} parent=39 // pred_check_branch
          %609 = sbr.rel (%p607) target = $region44
        $region43: #{tpu_custom_call.1} parent=39 // pred_region
          %s610 = smul.u32 8, %s19
          %s612 = ssub.s32 1024, 1024
          %613 = vsyncadd %s603, %s612
          %s614 = smul.addr %s610, 128
          %s615 = scalar_lea.hbm %s5, %s614
          %s616 = sshll.u32 %s606, 4
          %s617 = int_to_ptr.vmem [resolvable:$true] %s616
          %622 = dma.vmem_to_hbm [thread:$0]  %s617, 1024, %s615, %s603, 128, 128, 8
        $region44: #{tpu_custom_call.1} parent=39 // pred_fallthru
          _
      $region40: #{tpu_custom_call.1} parent=5 // pred_fallthru
        _
      %p623 = scmp.le.s32.totalorder 2, %s14
      // Predicated region
      $region45: #{tpu_custom_call.1} parent=5 // pred_check
        %p624 = pneg %p623
      $region46: #{tpu_custom_call.1} parent=5 // pred_check_branch
        %626 = sbr.rel (%p624) target = $region48
      $region47: #{tpu_custom_call.1} parent=5 // pred_region
        %s627 = ssub.s32 %s14, 2
        // Predicated region
        $region49: #{tpu_custom_call.1} parent=47 // pred_check
          %p628 = pneg %p153
        $region50: #{tpu_custom_call.1} parent=47 // pred_check_branch
          %630 = sbr.rel (%p628) target = $region52
        $region51: #{tpu_custom_call.1} parent=47 // pred_region
          %s631 = sand.u32 %s138, 1
          %s632 = scalar_lea.sflag [#allocation3], %s631
          %s633 = sand.u32 %s138, 1
          %s634 = smul.addr %s633, 64
          %s635 = scalar_lea.vmem [#allocation2], %s634
          %636 = dma.done %s632, 1024
        $region52: #{tpu_custom_call.1} parent=47 // pred_fallthru
          _
      $region48: #{tpu_custom_call.1} parent=5 // pred_fallthru
        _
    $region6: #{tpu_custom_call.1} parent=1 // loop_footer
      %s18 = sadd.s32 1, %s14
    $region7: #{tpu_custom_call.1} parent=1 // loop_footer_branch
      %13 = sbr.rel target = $region3
    $region8: #{tpu_custom_call.1} parent=1 // loop_exit
      _
    %637 = vsyncpa [#allocation3], 1
    %s638 = scalar_lea.sflag [#allocation3], 1
    %639 = vsyncpa %s638, 1

</llo_original>
